<compile_context>
chip_gen: v6e
topology: v6e:2x2x1
jax: 0.10.0
libtpu: 0.0.40
codegen_flags: <defaults>
</compile_context>

<pallas_src>
import jax
import jax.numpy as jnp
from jax.experimental import pallas as pl
from jax.experimental.pallas import tpu as pltpu

_LANES = 128
_SUBLANES = 8
_MAX_TILE_BYTES = 1 << 20  # ~1 MiB per input tile (per pipeline buffer)


def _content_loss_kernel(x_ref, t_ref, partial_ref):
    # Squared differences for this tile, folded onto one (8, 128) vreg using
    # only leading-axis (VPU) adds; the single cross-lane reduce happens once
    # in the wrapper, not per grid step.
    d = x_ref[...].astype(jnp.float32) - t_ref[...].astype(jnp.float32)
    sq = d * d
    partial_ref[...] = jnp.sum(sq.reshape(-1, _SUBLANES, _LANES), axis=0)


def content_loss(x, target):
    """Returns (input_passthrough, mse_loss_scalar), matching ContentLoss.forward."""
    assert x.shape == target.shape, "input / target shape mismatch"
    total_n = 1
    for d in x.shape:
        total_n *= d

    # Sublane granularity depends on dtype packing: f32 -> 8, bf16 -> 16, int8 -> 32.
    itemsize = jnp.dtype(x.dtype).itemsize
    sublane_mult = _SUBLANES * max(1, 4 // itemsize)
    # Row tile sized so one input tile is ~1 MiB for any dtype.
    max_row_tile = _MAX_TILE_BYTES // (_LANES * itemsize)
    max_row_tile = max(sublane_mult, (max_row_tile // sublane_mult) * sublane_mult)

    rows = pl.cdiv(total_n, _LANES)
    rows_aligned = pl.cdiv(rows, sublane_mult) * sublane_mult
    row_tile = min(max_row_tile, rows_aligned)
    padded_rows = pl.cdiv(rows_aligned, row_tile) * row_tile
    num_blocks = padded_rows // row_tile

    flat_x = x.reshape(-1)
    flat_t = target.reshape(-1)
    pad = padded_rows * _LANES - total_n
    if pad:
        # Zero-pad both sides: padded elements contribute exactly 0 to the sum.
        flat_x = jnp.pad(flat_x, (0, pad))
        flat_t = jnp.pad(flat_t, (0, pad))
    x2 = flat_x.reshape(padded_rows, _LANES)
    t2 = flat_t.reshape(padded_rows, _LANES)

    partials = pl.pallas_call(
        _content_loss_kernel,
        out_shape=jax.ShapeDtypeStruct((num_blocks * _SUBLANES, _LANES), jnp.float32),
        grid=(num_blocks,),
        in_specs=[
            pl.BlockSpec((row_tile, _LANES), lambda i: (i, 0)),
            pl.BlockSpec((row_tile, _LANES), lambda i: (i, 0)),
        ],
        out_specs=pl.BlockSpec((_SUBLANES, _LANES), lambda i: (i, 0)),
        compiler_params=pltpu.CompilerParams(
            dimension_semantics=("parallel",),
        ),
    )(x2, t2)

    # Tiny final reduction + precomputed reciprocal of N (multiply, not divide).
    loss = jnp.sum(partials) * jnp.float32(1.0 / total_n)

    # ContentLoss.forward returns its input unchanged; no copy is materialized.
    return x, loss


if __name__ == "__main__":
    key = jax.random.PRNGKey(0)
    k1, k2 = jax.random.split(key)

    # NCHW: batch=2, channels=4, spatial=16x16 (the detached target)
    x = jax.random.normal(k1, (2, 4, 16, 16), dtype=jnp.float32)
    target = jax.random.normal(k2, (2, 4, 16, 16), dtype=jnp.float32)

    passthrough, loss = content_loss(x, target)
    passthrough = jax.block_until_ready(passthrough)
    loss = jax.block_until_ready(loss)

    # Reference check (plain JAX): F.mse_loss default = mean reduction
    ref_loss = jnp.mean((x - target) ** 2)
    assert jnp.allclose(loss, ref_loss, rtol=1e-5, atol=1e-6), (loss, ref_loss)
    assert jnp.array_equal(passthrough, x)

    print("KERNEL_OK")
</pallas_src>

<mosaic_0001>
module attributes {stable_mosaic.version = 11 : i64} {
  func.func @_content_loss_kernel(%arg0: i32, %arg1: memref<16x128xf32, #tpu.memory_space<vmem>>, %arg2: memref<16x128xf32, #tpu.memory_space<vmem>>, %arg3: memref<8x128xf32, #tpu.memory_space<vmem>>) attributes {dimension_semantics = [#tpu.dimension_semantics<parallel>], iteration_bounds = array<i64: 1>, scalar_prefetch = 0 : i64, scratch_operands = 0 : i64, tpu.core_type = #tpu.core_type<tc>, window_params = [{transform_indices = @transform_0, window_bounds = array<i64: 16, 128>}, {transform_indices = @transform_1, window_bounds = array<i64: 16, 128>}, {transform_indices = @transform_2, window_bounds = array<i64: 8, 128>}]} {
    %c0 = arith.constant 0 : index
    %c0_0 = arith.constant 0 : index
    %0 = vector.load %arg1[%c0, %c0_0] : memref<16x128xf32, #tpu.memory_space<vmem>>, vector<16x128xf32>
    %c0_1 = arith.constant 0 : index
    %c0_2 = arith.constant 0 : index
    %1 = vector.load %arg2[%c0_1, %c0_2] : memref<16x128xf32, #tpu.memory_space<vmem>>, vector<16x128xf32>
    %2 = arith.subf %0, %1 : vector<16x128xf32>
    %3 = arith.mulf %2, %2 : vector<16x128xf32>
    %4 = vector.shape_cast %3 : vector<16x128xf32> to vector<2x8x128xf32>
    %cst = arith.constant dense<0.000000e+00> : vector<8x128xf32>
    %5 = vector.multi_reduction <add>, %4, %cst [0] : vector<2x8x128xf32> to vector<8x128xf32>
    %c0_3 = arith.constant 0 : index
    %c0_4 = arith.constant 0 : index
    %6 = vector.load %arg3[%c0_3, %c0_4] : memref<8x128xf32, #tpu.memory_space<vmem>>, vector<8x128xf32>
    tpu.vector_store %arg3[%c0_3, %c0_4], %5 {strides = array<i32>} : memref<8x128xf32, #tpu.memory_space<vmem>>, vector<8x128xf32>,
    return
  }
  func.func @transform_0(%arg0: i32) -> (i32, i32) {
    %c0_i32 = arith.constant 0 : i32
    %c0_i32_0 = arith.constant 0 : i32
    return %arg0, %c0_i32 : i32, i32
  }
  func.func @transform_1(%arg0: i32) -> (i32, i32) {
    %c0_i32 = arith.constant 0 : i32
    %c0_i32_0 = arith.constant 0 : i32
    return %arg0, %c0_i32 : i32, i32
  }
  func.func @transform_2(%arg0: i32) -> (i32, i32) {
    %c0_i32 = arith.constant 0 : i32
    %c0_i32_0 = arith.constant 0 : i32
    return %arg0, %c0_i32 : i32, i32
  }
}

</mosaic_0001>

<llo_original>
// kernel: tpu_custom_call.1
$region0: #{tpu_custom_call.1}
  #allocation0 [shape = 'u32[]', space=smem, size = 0x4, offset = 0x4, fixed_abs, tag = 'smem constant byte address 0x4 - core index']
  #allocation1 [shape = 'u32[144,128]{1,0:T(1,128)}', space=vmem, size = 0x12000, scoped, tag = 'internal scratch']
  %s0 = inlined_call_operand.hbm [shape: f32[16,128], index: 0, kind: input, shape index: {}]
  %s1 = inlined_call_operand.hbm [shape: f32[16,128], index: 1, kind: input, shape index: {}]
  %s2 = inlined_call_operand.hbm [shape: f32[8,128], index: 2, kind: output, shape index: {}]
  %s3 = sld [smem:[#allocation0]]
  $region26: #{tpu_custom_call.1} parent=0
    _
  %s5 = ssub.s32 1, %s3
  %s6 = scalar_select 0, %s5, %s3
  $region1: #{tpu_custom_call.1} parent=0
    #allocation2 [shape = 'u8[8192]{0}', space=vmem, size = 0x2000, scoped, tag = 'input window, operand 0, single buffered']
    #allocation3 [shape = 's32[1]{0}', space=sflag, size = 0x4, scoped, tag = 'scoped memory for tpu_custom_call.1']
    #allocation4 [shape = 's32[1]{0}', space=sflag, size = 0x4, scoped, tag = 'scoped memory for tpu_custom_call.1']
    #allocation5 [shape = 'u8[8192]{0}', space=vmem, size = 0x2000, scoped, tag = 'input window, operand 1, single buffered']
    #allocation6 [shape = 's32[1]{0}', space=sflag, size = 0x4, scoped, tag = 'scoped memory for tpu_custom_call.1']
    #allocation7 [shape = 'u8[4096]{0}', space=vmem, size = 0x1000, scoped, tag = 'output window, operand 0, single buffered']
    %7 = vsyncpa [#allocation3], 0
    %8 = vsyncpa [#allocation6], 0
    %9 = vsyncpa [#allocation4], 0
    // Predicated region
    $region2: #{tpu_custom_call.1} parent=1 // pred_check
      _
    $region3: #{tpu_custom_call.1} parent=1 // pred_check_branch
      %11 = sbr.rel (0) target = $region5
    $region4: #{tpu_custom_call.1} parent=1 // pred_region
      %s13 = ssub.s32 256, 256
      %14 = vsyncadd [#allocation3], %s13
      %s15 = sshll.u32 [#allocation2], 4
      %s16 = int_to_ptr.vmem [resolvable:$true] %s15
      %21 = dma.hbm_to_vmem [thread:$0]  %s0, 256, %s16, [#allocation3], 128, 128, 8
    $region5: #{tpu_custom_call.1} parent=1 // pred_fallthru
      _
    // Predicated region
    $region6: #{tpu_custom_call.1} parent=1 // pred_check
      _
    $region7: #{tpu_custom_call.1} parent=1 // pred_check_branch
      %23 = sbr.rel (0) target = $region9
    $region8: #{tpu_custom_call.1} parent=1 // pred_region
      %s25 = ssub.s32 256, 256
      %26 = vsyncadd [#allocation6], %s25
      %s27 = sshll.u32 [#allocation5], 4
      %s28 = int_to_ptr.vmem [resolvable:$true] %s27
      %33 = dma.hbm_to_vmem [thread:$0]  %s1, 256, %s28, [#allocation6], 128, 128, 8
    $region9: #{tpu_custom_call.1} parent=1 // pred_fallthru
      _
    // Predicated region
    $region10: #{tpu_custom_call.1} parent=1 // pred_check
      _
    $region11: #{tpu_custom_call.1} parent=1 // pred_check_branch
      %35 = sbr.rel (0) target = $region13
    $region12: #{tpu_custom_call.1} parent=1 // pred_region
      %36 = dma.done [#allocation3], 256
    $region13: #{tpu_custom_call.1} parent=1 // pred_fallthru
      _
    // Predicated region
    $region14: #{tpu_custom_call.1} parent=1 // pred_check
      _
    $region15: #{tpu_custom_call.1} parent=1 // pred_check_branch
      %38 = sbr.rel (0) target = $region17
    $region16: #{tpu_custom_call.1} parent=1 // pred_region
      %39 = dma.done [#allocation6], 256
    $region17: #{tpu_custom_call.1} parent=1 // pred_fallthru
      _
    %v40 = vld [vmem:[#allocation2] sm:$0xff]
    %v41 = vld [vmem:[#allocation2 + $0x8] sm:$0xff]
    %v42 = vld [vmem:[#allocation5] sm:$0xff]
    %v43 = vld [vmem:[#allocation5 + $0x8] sm:$0xff]
    %v44 = vsub.f32 %v40, %v42
    %v45 = vsub.f32 %v41, %v43
    %v46 = vmul.f32 %v44, %v44
    %v47 = vmul.f32 %v45, %v45
    %v48 = vadd.f32 %v46, %v47
    %49 = vst [vmem:[#allocation7] sm:$0xff] %v48
    // Predicated region
    $region18: #{tpu_custom_call.1} parent=1 // pred_check
      _
    $region19: #{tpu_custom_call.1} parent=1 // pred_check_branch
      %51 = sbr.rel (0) target = $region21
    $region20: #{tpu_custom_call.1} parent=1 // pred_region
      %s53 = ssub.s32 128, 128
      %54 = vsyncadd [#allocation4], %s53
      %s56 = sshll.u32 [#allocation7], 4
      %s57 = int_to_ptr.vmem [resolvable:$true] %s56
      %59 = dma.vmem_to_hbm [thread:$0]  %s57, 128, %s2, [#allocation4]
    $region21: #{tpu_custom_call.1} parent=1 // pred_fallthru
      _
    // Predicated region
    $region22: #{tpu_custom_call.1} parent=1 // pred_check
      _
    $region23: #{tpu_custom_call.1} parent=1 // pred_check_branch
      %61 = sbr.rel (0) target = $region25
    $region24: #{tpu_custom_call.1} parent=1 // pred_region
      %62 = dma.done [#allocation4], 128
    $region25: #{tpu_custom_call.1} parent=1 // pred_fallthru
      _
    %63 = vsyncpa [#allocation3], 1
    %64 = vsyncpa [#allocation6], 1
    %65 = vsyncpa [#allocation4], 1

</llo_original>
